<compile_context>
chip_gen: v7x
topology: tpu7x:2x2x1
jax: 0.10.0
libtpu: 0.0.40
codegen_flags: <defaults>
</compile_context>

<pallas_src>
import functools

import jax
import jax.numpy as jnp
from jax.experimental import pallas as pl
from jax.experimental.pallas import tpu as pltpu


# ---------------------------------------------------------------------------
# helpers
# ---------------------------------------------------------------------------

def _round_up(x, m):
    return ((x + m - 1) // m) * m


def _vmem_budget():
    """Generation-aware scoped-VMEM budget (bytes)."""
    try:
        cap = int(pltpu.get_tpu_info().vmem_capacity_bytes)
    except Exception:
        cap = 64 << 20  # conservative: v7x per-TensorCore VMEM
    return int(0.8 * cap)  # ~51 MiB on v7x, ~102 MiB on v5e/v6e


def _yuv_diff(a, b):
    """RGB difference -> (dY, dU, dV).  a, b: (3, rows, W)."""
    d = a - b
    r, g, bl = d[0], d[1], d[2]
    dy = 0.299 * r + 0.587 * g + 0.114 * bl
    du = -0.14713 * r - 0.28886 * g + 0.436 * bl
    dv = 0.615 * r - 0.51499 * g - 0.10001 * bl
    return dy, du, dv


# ---------------------------------------------------------------------------
# Path 1: whole image per grid step (small / medium images).
# ---------------------------------------------------------------------------

def _yuv_loss_whole_kernel(bh_ref, bw_ref, inp_ref, tgt_ref, out_ref, *, fuse_lanes):
    """One batch element per grid step.

    bh_ref: (H, H) bf16   bw_ref: (W, W) bf16   (resident, constant index_map)
    inp_ref / tgt_ref: (1, 3, H, W)             out_ref: (1, 1, 1) f32
    """
    a = inp_ref[0].astype(jnp.float32)
    b = tgt_ref[0].astype(jnp.float32)
    dy, du, dv = _yuv_diff(a, b)                     # f32 VPU math (small images)
    H, W = dy.shape
    bh = bh_ref[...]
    bw = bw_ref[...]

    if fuse_lanes:
        # W < 256: fuse the 3 channels to fill the MXU.
        d3h = jnp.concatenate([dy, du, dv], axis=0).astype(jnp.bfloat16)   # (3H, W)
        s = jnp.dot(d3h, bw, preferred_element_type=jnp.float32)           # (3H, W)
        s3w = jnp.concatenate([s[0:H], s[H:2 * H], s[2 * H:3 * H]], axis=1)
        s3w = s3w.astype(jnp.bfloat16)                                      # (H, 3W)
        filt = jnp.dot(bh, s3w, preferred_element_type=jnp.float32)        # (H, 3W)
        total = jnp.sum(filt * filt)
    else:
        # W >= 256: per-channel dots, accumulate sum(filt^2) so each f32
        # result dies early (no lane re-stack copies).
        total = jnp.zeros((), jnp.float32)
        for ch in (dy, du, dv):
            s = jnp.dot(ch.astype(jnp.bfloat16), bw,
                        preferred_element_type=jnp.float32)                # (H, W)
            f = jnp.dot(bh, s.astype(jnp.bfloat16),
                        preferred_element_type=jnp.float32)                # (H, W)
            total = total + jnp.sum(f * f)

    out_ref[...] = total.reshape(1, 1, 1)


def _yuv_loss_whole(inp, tgt, pad, budget):
    N, C, H, W = inp.shape

    # Band matrices, built once in the wrapper, bf16 (0/1 values are exact).
    ih = jnp.arange(H)
    iw = jnp.arange(W)
    bh = (jnp.abs(ih[:, None] - ih[None, :]) <= pad).astype(jnp.bfloat16)
    bw = (jnp.abs(iw[:, None] - iw[None, :]) <= pad).astype(jnp.bfloat16)

    kernel = functools.partial(_yuv_loss_whole_kernel, fuse_lanes=(W < 256))
    partials = pl.pallas_call(
        kernel,
        out_shape=jax.ShapeDtypeStruct((N, 1, 1), jnp.float32),
        grid=(N,),
        in_specs=[
            pl.BlockSpec((H, H), lambda n: (0, 0)),            # bh: resident
            pl.BlockSpec((W, W), lambda n: (0, 0)),            # bw: resident
            pl.BlockSpec((1, C, H, W), lambda n: (n, 0, 0, 0)),
            pl.BlockSpec((1, C, H, W), lambda n: (n, 0, 0, 0)),
        ],
        out_specs=pl.BlockSpec((1, 1, 1), lambda n: (n, 0, 0)),
        compiler_params=pltpu.CompilerParams(
            dimension_semantics=("parallel",),      # batch axis across TCs (v7x)
            vmem_limit_bytes=budget,
        ),
    )(bh, bw, inp, tgt)

    # Each F.mse_loss averages over N*1*H*W elements; loss is the sum of 3.
    return jnp.sum(partials) / float(N * H * W)


# ---------------------------------------------------------------------------
# Path 2: H-tiled (large images / v7x 64 MiB VMEM).
# ---------------------------------------------------------------------------

def _yuv_loss_tiled_kernel(bw_ref, bhc_ref, bhp_ref, bhn_ref,
                           inp_c_ref, inp_p_ref, inp_n_ref,
                           tgt_c_ref, tgt_p_ref, tgt_n_ref,
                           out_ref):
    """One (image, H-tile) pair per grid step.

    bw_ref : (W, W) bf16 band (resident)
    bhc/bhp/bhn : (1, TH, TH) / (1, TH, HB) per-tile band blocks
                  (boundary / padded-row masking baked in by the wrapper)
    *_c_ref : (1, 3, TH, W) current tile   *_p/_n_ref : (1, 3, HB, W) halo rows
    out_ref : (1, 1, 1, 1) f32 partial sum for this (image, tile)
    """
    cdt = jnp.bfloat16  # bf16 diff/YUV: halves the live set (v6e/v7x bf16 VALU)

    yc = _yuv_diff(inp_c_ref[0].astype(cdt), tgt_c_ref[0].astype(cdt))  # (TH, W) x3
    yp = _yuv_diff(inp_p_ref[0].astype(cdt), tgt_p_ref[0].astype(cdt))  # (HB, W) x3
    yn = _yuv_diff(inp_n_ref[0].astype(cdt), tgt_n_ref[0].astype(cdt))  # (HB, W) x3

    bw = bw_ref[...]
    bhc = bhc_ref[0]
    bhp = bhp_ref[0]
    bhn = bhn_ref[0]

    total = jnp.zeros((), jnp.float32)
    for c in range(3):
        # Banded H-filter: only the current tile plus HB halo rows contribute.
        u = (jnp.dot(bhc, yc[c], preferred_element_type=jnp.float32)
             + jnp.dot(bhp, yp[c], preferred_element_type=jnp.float32)
             + jnp.dot(bhn, yn[c], preferred_element_type=jnp.float32))   # (TH, W) f32
        f = jnp.dot(u.astype(cdt), bw, preferred_element_type=jnp.float32)  # (TH, W)
        total = total + jnp.sum(f * f)

    out_ref[...] = total.reshape(1, 1, 1, 1)


def _yuv_loss_tiled(inp, tgt, pad, tile_rows, budget):
    N, C, H, W = inp.shape
    isz = jnp.dtype(inp.dtype).itemsize

    # Halo block rows: smallest sublane multiple covering the filter reach.
    HB = max(8, _round_up(pad, 8))

    def est(th):
        blocks = 2 * 2 * 3 * th * W * isz + 4 * 2 * 3 * HB * W * isz  # double-buffered
        bands = 2 * 2 * (W * W + th * th + 2 * th * HB)               # bf16
        inter = 26 * th * W + 16 * HB * W                             # diffs / u / filt
        return blocks + bands + inter + (4 << 20)

    if tile_rows is not None:
        TH = max(HB, _round_up(int(tile_rows), HB))
    else:
        TH = min(512, _round_up(H, HB))
        while TH > HB and est(TH) > budget:
            TH -= HB

    RT = -(-H // TH)
    H_pad = RT * TH
    if H_pad != H:
        pads = ((0, 0), (0, 0), (0, H_pad - H), (0, 0))
        inp = jnp.pad(inp, pads)   # zero-padded diff rows contribute nothing
        tgt = jnp.pad(tgt, pads)
    THB = TH // HB
    NHB = H_pad // HB

    # ---- band matrices / per-tile band blocks (bf16, built once) ----------
    iw = jnp.arange(W)
    bw = (jnp.abs(iw[:, None] - iw[None, :]) <= pad).astype(jnp.bfloat16)

    r = jnp.arange(RT)[:, None, None]
    i = jnp.arange(TH)[None, :, None]
    j = jnp.arange(TH)[None, None, :]
    jh = jnp.arange(HB)[None, None, :]
    row_ok = (r * TH + i) < H                       # mask padded output rows
    bh_curr = ((jnp.abs(i - j) <= pad) & row_ok).astype(jnp.bfloat16)            # (RT,TH,TH)
    bh_prev = ((jnp.abs(i - (jh - HB)) <= pad) & (r >= 1) & row_ok
               ).astype(jnp.bfloat16)                                             # (RT,TH,HB)
    bh_next = ((jnp.abs(i - (TH + jh)) <= pad) & (r < RT - 1) & row_ok
               ).astype(jnp.bfloat16)                                             # (RT,TH,HB)

    # ---- block specs -------------------------------------------------------
    curr_spec = pl.BlockSpec((1, 3, TH, W), lambda n, rr: (n, 0, rr, 0))
    prev_spec = pl.BlockSpec(
        (1, 3, HB, W),
        lambda n, rr: (n, 0, jnp.maximum(rr * THB - 1, 0), 0))      # clamped; r=0 band is 0
    next_spec = pl.BlockSpec(
        (1, 3, HB, W),
        lambda n, rr: (n, 0, jnp.minimum((rr + 1) * THB, NHB - 1), 0))

    partials = pl.pallas_call(
        _yuv_loss_tiled_kernel,
        out_shape=jax.ShapeDtypeStruct((N, RT, 1, 1), jnp.float32),
        grid=(N, RT),
        in_specs=[
            pl.BlockSpec((W, W), lambda n, rr: (0, 0)),             # bw: resident
            pl.BlockSpec((1, TH, TH), lambda n, rr: (rr, 0, 0)),    # bh_curr[r]
            pl.BlockSpec((1, TH, HB), lambda n, rr: (rr, 0, 0)),    # bh_prev[r]
            pl.BlockSpec((1, TH, HB), lambda n, rr: (rr, 0, 0)),    # bh_next[r]
            curr_spec, prev_spec, next_spec,                        # input blocks
            curr_spec, prev_spec, next_spec,                        # target blocks
        ],
        out_specs=pl.BlockSpec((1, 1, 1, 1), lambda n, rr: (n, rr, 0, 0)),
        compiler_params=pltpu.CompilerParams(
            dimension_semantics=("parallel", "parallel"),  # both axes megacore-shardable
            vmem_limit_bytes=budget,
        ),
    )(bw, bh_curr, bh_prev, bh_next, inp, inp, inp, tgt, tgt, tgt)

    # Normalize by the ORIGINAL H (padded output rows are band-masked to 0).
    return jnp.sum(partials) / float(N * H * W)


# ---------------------------------------------------------------------------
# public wrapper
# ---------------------------------------------------------------------------

def yuv_channel_loss(inp, tgt, patch_size=15, *, tile_rows=None):
    """Pallas implementation of YUVChannelLoss.forward (inputs NCHW, C == 3).

    tile_rows: None -> automatic path selection; an int forces the H-tiled
    path with (roughly) that many output rows per tile.
    """
    N, C, H, W = inp.shape
    assert C == 3, "RGB->YUV conversion expects C == 3"
    assert tgt.shape == inp.shape
    # The |i-j| <= pad band matrix reproduces F.conv2d(padding=ps//2) only for
    # odd patch sizes (even sizes change PyTorch's output geometry).
    assert patch_size % 2 == 1, "patch_size must be odd"
    pad = patch_size // 2

    budget = _vmem_budget()
    isz = jnp.dtype(inp.dtype).itemsize
    whole_est = (2 * 2 * 3 * H * W * isz        # inp+tgt blocks, double-buffered
                 + 2 * 2 * (H * H + W * W)      # bf16 band matrices
                 + 80 * H * W                   # f32/bf16 intermediates (generous)
                 + (4 << 20))                   # compiler scratch headroom

    if tile_rows is None and whole_est <= budget:
        return _yuv_loss_whole(inp, tgt, pad, budget)
    return _yuv_loss_tiled(inp, tgt, pad, tile_rows, budget)


# ---------------------------------------------------------------------------
# pure-JAX reference (mirrors the PyTorch forward), for verification
# ---------------------------------------------------------------------------

def _reference_loss(inp, tgt, patch_size=15):
    pad = patch_size // 2
    kern = jnp.ones((1, 1, patch_size, patch_size), jnp.float32)

    def yuv(img):
        r, g, b = img[:, 0], img[:, 1], img[:, 2]
        y = 0.299 * r + 0.587 * g + 0.114 * b
        u = -0.14713 * r - 0.28886 * g + 0.436 * b
        v = 0.615 * r - 0.51499 * g - 0.10001 * b
        return y, u, v

    def conv(ch):  # ch: (N, H, W)
        return jax.lax.conv_general_dilated(
            ch[:, None], kern, (1, 1), [(pad, pad), (pad, pad)]
        )

    yi, ui, vi = yuv(inp.astype(jnp.float32))
    yt, ut, vt = yuv(tgt.astype(jnp.float32))
    loss = 0.0
    for a, b in ((yi, yt), (ui, ut), (vi, vt)):
        loss = loss + jnp.mean((conv(a) - conv(b)) ** 2)
    return loss


if __name__ == "__main__":
    key = jax.random.PRNGKey(0)
    k1, k2, k3, k4, k5, k6 = jax.random.split(key, 6)

    # 1) Whole-image path, lane-fused branch (W < 256), default patch_size=15.
    inp = jax.random.uniform(k1, (2, 3, 16, 16), dtype=jnp.float32)
    tgt = jax.random.uniform(k2, (2, 3, 16, 16), dtype=jnp.float32)
    loss = yuv_channel_loss(inp, tgt, patch_size=15)
    jax.block_until_ready(loss)
    ref = _reference_loss(inp, tgt, patch_size=15)
    assert jnp.allclose(loss, ref, rtol=2e-2, atol=2e-2), (float(loss), float(ref))

    # 2) Forced H-tiled path: exercises halo blocks, boundary-zero band blocks,
    #    H padding/masking (H=20 -> H_pad=24, 3 tiles of 8 rows).
    inp2 = jax.random.uniform(k3, (2, 3, 20, 16), dtype=jnp.float32)
    tgt2 = jax.random.uniform(k4, (2, 3, 20, 16), dtype=jnp.float32)
    loss2 = yuv_channel_loss(inp2, tgt2, patch_size=5, tile_rows=8)
    jax.block_until_ready(loss2)
    ref2 = _reference_loss(inp2, tgt2, patch_size=5)
    assert jnp.allclose(loss2, ref2, rtol=2e-2, atol=2e-2), (float(loss2), float(ref2))

    # 3) Whole-image path, per-channel branch (W >= 256, no lane re-stack).
    inp3 = jax.random.uniform(k5, (1, 3, 16, 256), dtype=jnp.float32)
    tgt3 = jax.random.uniform(k6, (1, 3, 16, 256), dtype=jnp.float32)
    loss3 = yuv_channel_loss(inp3, tgt3, patch_size=7)
    jax.block_until_ready(loss3)
    ref3 = _reference_loss(inp3, tgt3, patch_size=7)
    assert jnp.allclose(loss3, ref3, rtol=2e-2, atol=2e-2), (float(loss3), float(ref3))

    print("KERNEL_OK")
</pallas_src>

<mosaic_0001>
module attributes {stable_mosaic.version = 11 : i64} {
  func.func @_yuv_loss_whole_kernel(%arg0: i32, %arg1: memref<16x16xbf16, #tpu.memory_space<vmem>>, %arg2: memref<16x16xbf16, #tpu.memory_space<vmem>>, %arg3: memref<1x3x16x16xf32, #tpu.memory_space<vmem>>, %arg4: memref<1x3x16x16xf32, #tpu.memory_space<vmem>>, %arg5: memref<1x1x1xf32, #tpu.memory_space<vmem>>) attributes {dimension_semantics = [#tpu.dimension_semantics<parallel>], iteration_bounds = array<i64: 2>, scalar_prefetch = 0 : i64, scratch_operands = 0 : i64, tpu.core_type = #tpu.core_type<tc>, window_params = [{pipeline_mode = #tpu.pipeline_mode<synchronous>, transform_indices = @transform_0, window_bounds = array<i64: 16, 16>}, {pipeline_mode = #tpu.pipeline_mode<synchronous>, transform_indices = @transform_1, window_bounds = array<i64: 16, 16>}, {transform_indices = @transform_2, window_bounds = array<i64: 1, 3, 16, 16>}, {transform_indices = @transform_3, window_bounds = array<i64: 1, 3, 16, 16>}, {transform_indices = @transform_4, window_bounds = array<i64: 1, 1, 1>}]} {
    %c0 = arith.constant 0 : index
    %c0_0 = arith.constant 0 : index
    %c0_1 = arith.constant 0 : index
    %c0_2 = arith.constant 0 : index
    %0 = vector.load %arg3[%c0, %c0_0, %c0_1, %c0_2] : memref<1x3x16x16xf32, #tpu.memory_space<vmem>>, vector<1x3x16x16xf32>
    %1 = vector.shape_cast %0 : vector<1x3x16x16xf32> to vector<3x16x16xf32>
    %c0_3 = arith.constant 0 : index
    %c0_4 = arith.constant 0 : index
    %c0_5 = arith.constant 0 : index
    %c0_6 = arith.constant 0 : index
    %2 = vector.load %arg4[%c0_3, %c0_4, %c0_5, %c0_6] : memref<1x3x16x16xf32, #tpu.memory_space<vmem>>, vector<1x3x16x16xf32>
    %3 = vector.shape_cast %2 : vector<1x3x16x16xf32> to vector<3x16x16xf32>
    %4 = arith.subf %1, %3 : vector<3x16x16xf32>
    %5 = vector.extract_strided_slice %4 {offsets = [0, 0, 0], sizes = [1, 16, 16], strides = [1, 1, 1]} : vector<3x16x16xf32> to vector<1x16x16xf32>
    %6 = vector.shape_cast %5 : vector<1x16x16xf32> to vector<16x16xf32>
    %7 = vector.extract_strided_slice %4 {offsets = [1, 0, 0], sizes = [1, 16, 16], strides = [1, 1, 1]} : vector<3x16x16xf32> to vector<1x16x16xf32>
    %8 = vector.shape_cast %7 : vector<1x16x16xf32> to vector<16x16xf32>
    %9 = vector.extract_strided_slice %4 {offsets = [2, 0, 0], sizes = [1, 16, 16], strides = [1, 1, 1]} : vector<3x16x16xf32> to vector<1x16x16xf32>
    %10 = vector.shape_cast %9 : vector<1x16x16xf32> to vector<16x16xf32>
    %cst = arith.constant 2.990000e-01 : f32
    %11 = vector.broadcast %cst : f32 to vector<16x16xf32>
    %12 = arith.mulf %11, %6 : vector<16x16xf32>
    %cst_7 = arith.constant 5.870000e-01 : f32
    %13 = vector.broadcast %cst_7 : f32 to vector<16x16xf32>
    %14 = arith.mulf %13, %8 : vector<16x16xf32>
    %15 = arith.addf %12, %14 : vector<16x16xf32>
    %cst_8 = arith.constant 1.140000e-01 : f32
    %16 = vector.broadcast %cst_8 : f32 to vector<16x16xf32>
    %17 = arith.mulf %16, %10 : vector<16x16xf32>
    %18 = arith.addf %15, %17 : vector<16x16xf32>
    %cst_9 = arith.constant -1.471300e-01 : f32
    %19 = vector.broadcast %cst_9 : f32 to vector<16x16xf32>
    %20 = arith.mulf %19, %6 : vector<16x16xf32>
    %cst_10 = arith.constant 2.888600e-01 : f32
    %21 = vector.broadcast %cst_10 : f32 to vector<16x16xf32>
    %22 = arith.mulf %21, %8 : vector<16x16xf32>
    %23 = arith.subf %20, %22 : vector<16x16xf32>
    %cst_11 = arith.constant 4.360000e-01 : f32
    %24 = vector.broadcast %cst_11 : f32 to vector<16x16xf32>
    %25 = arith.mulf %24, %10 : vector<16x16xf32>
    %26 = arith.addf %23, %25 : vector<16x16xf32>
    %cst_12 = arith.constant 6.150000e-01 : f32
    %27 = vector.broadcast %cst_12 : f32 to vector<16x16xf32>
    %28 = arith.mulf %27, %6 : vector<16x16xf32>
    %cst_13 = arith.constant 5.149900e-01 : f32
    %29 = vector.broadcast %cst_13 : f32 to vector<16x16xf32>
    %30 = arith.mulf %29, %8 : vector<16x16xf32>
    %31 = arith.subf %28, %30 : vector<16x16xf32>
    %cst_14 = arith.constant 1.000100e-01 : f32
    %32 = vector.broadcast %cst_14 : f32 to vector<16x16xf32>
    %33 = arith.mulf %32, %10 : vector<16x16xf32>
    %34 = arith.subf %31, %33 : vector<16x16xf32>
    %c0_15 = arith.constant 0 : index
    %c0_16 = arith.constant 0 : index
    %35 = vector.load %arg1[%c0_15, %c0_16] : memref<16x16xbf16, #tpu.memory_space<vmem>>, vector<16x16xbf16>
    %c0_17 = arith.constant 0 : index
    %c0_18 = arith.constant 0 : index
    %36 = vector.load %arg2[%c0_17, %c0_18] : memref<16x16xbf16, #tpu.memory_space<vmem>>, vector<16x16xbf16>
    %37 = tpu.concatenate %18, %26, %34 in 0 : vector<16x16xf32>, vector<16x16xf32>, vector<16x16xf32> -> vector<48x16xf32>
    %38 = arith.truncf %37 : vector<48x16xf32> to vector<48x16xbf16>
    %cst_19 = arith.constant dense<0.000000e+00> : vector<48x16xf32>
    %39 = tpu.matmul %38, %36, %cst_19 {dimension_numbers = #tpu.dot_dimension_numbers<[1], [0], [0], [1], [0, 0, 1, 1], [], []>} : vector<48x16xbf16>, vector<16x16xbf16>, vector<48x16xf32> -> vector<48x16xf32>
    %40 = vector.extract_strided_slice %39 {offsets = [0, 0], sizes = [16, 16], strides = [1, 1]} : vector<48x16xf32> to vector<16x16xf32>
    %41 = vector.extract_strided_slice %39 {offsets = [16, 0], sizes = [16, 16], strides = [1, 1]} : vector<48x16xf32> to vector<16x16xf32>
    %42 = vector.extract_strided_slice %39 {offsets = [32, 0], sizes = [16, 16], strides = [1, 1]} : vector<48x16xf32> to vector<16x16xf32>
    %43 = tpu.concatenate %40, %41, %42 in 1 : vector<16x16xf32>, vector<16x16xf32>, vector<16x16xf32> -> vector<16x48xf32>
    %44 = arith.truncf %43 : vector<16x48xf32> to vector<16x48xbf16>
    %cst_20 = arith.constant dense<0.000000e+00> : vector<16x48xf32>
    %45 = tpu.matmul %35, %44, %cst_20 {dimension_numbers = #tpu.dot_dimension_numbers<[1], [0], [0], [1], [0, 0, 1, 1], [], []>} : vector<16x16xbf16>, vector<16x48xbf16>, vector<16x48xf32> -> vector<16x48xf32>
    %46 = arith.mulf %45, %45 : vector<16x48xf32>
    %47 = vector.shape_cast %46 : vector<16x48xf32> to vector<1x16x48xf32>
    %cst_21 = arith.constant dense<0.000000e+00> : vector<1xf32>
    %48 = vector.multi_reduction <add>, %47, %cst_21 [1, 2] : vector<1x16x48xf32> to vector<1xf32>
    %49 = vector.shape_cast %48 : vector<1xf32> to vector<1x1x1xf32>
    %50 = vector.extract %49[0, 0, 0] : f32 from vector<1x1x1xf32>
    %51 = vector.broadcast %50 : f32 to vector<1x1x1xf32>
    %c0_22 = arith.constant 0 : index
    %c0_23 = arith.constant 0 : index
    %c0_24 = arith.constant 0 : index
    %52 = vector.load %arg5[%c0_22, %c0_23, %c0_24] : memref<1x1x1xf32, #tpu.memory_space<vmem>>, vector<1x1x1xf32>
    tpu.vector_store %arg5[%c0_22, %c0_23, %c0_24], %51 {strides = array<i32>} : memref<1x1x1xf32, #tpu.memory_space<vmem>>, vector<1x1x1xf32>,
    return
  }
  func.func @transform_0(%arg0: i32) -> (i32, i32) {
    %c0_i32 = arith.constant 0 : i32
    %c0_i32_0 = arith.constant 0 : i32
    %c0_i32_1 = arith.constant 0 : i32
    return %c0_i32, %c0_i32_0 : i32, i32
  }
  func.func @transform_1(%arg0: i32) -> (i32, i32) {
    %c0_i32 = arith.constant 0 : i32
    %c0_i32_0 = arith.constant 0 : i32
    %c0_i32_1 = arith.constant 0 : i32
    return %c0_i32, %c0_i32_0 : i32, i32
  }
  func.func @transform_2(%arg0: i32) -> (i32, i32, i32, i32) {
    %c0_i32 = arith.constant 0 : i32
    %c0_i32_0 = arith.constant 0 : i32
    %c0_i32_1 = arith.constant 0 : i32
    %c0_i32_2 = arith.constant 0 : i32
    return %arg0, %c0_i32, %c0_i32_0, %c0_i32_1 : i32, i32, i32, i32
  }
  func.func @transform_3(%arg0: i32) -> (i32, i32, i32, i32) {
    %c0_i32 = arith.constant 0 : i32
    %c0_i32_0 = arith.constant 0 : i32
    %c0_i32_1 = arith.constant 0 : i32
    %c0_i32_2 = arith.constant 0 : i32
    return %arg0, %c0_i32, %c0_i32_0, %c0_i32_1 : i32, i32, i32, i32
  }
  func.func @transform_4(%arg0: i32) -> (i32, i32, i32) {
    %c0_i32 = arith.constant 0 : i32
    %c0_i32_0 = arith.constant 0 : i32
    %c0_i32_1 = arith.constant 0 : i32
    return %arg0, %c0_i32, %c0_i32_0 : i32, i32, i32
  }
}

</mosaic_0001>

<llo_original>
// kernel: tpu_custom_call.1
$region0: #{tpu_custom_call.1}
  #allocation0 [shape = 'u32[]', space=smem, size = 0x4, offset = 0x4, fixed_abs, tag = 'smem constant byte address 0x4 - core index']
  #allocation1 [shape = 'u32[144,128]{1,0:T(1,128)}', space=vmem, size = 0x12000, scoped, tag = 'internal scratch']
  %s0 = inlined_call_operand.hbm [shape: bf16[16,16], index: 0, kind: input, shape index: {}]
  %s1 = inlined_call_operand.hbm [shape: bf16[16,16], index: 1, kind: input, shape index: {}]
  %s2 = inlined_call_operand.hbm [shape: f32[2,3,16,16], index: 2, kind: input, shape index: {}]
  %s3 = inlined_call_operand.hbm [shape: f32[2,3,16,16], index: 3, kind: input, shape index: {}]
  %s4 = inlined_call_operand.vmem [shape: f32[2,1,1], index: 4, kind: output, shape index: {}]
  %s5 = sld [smem:[#allocation0]]
  $region65: #{tpu_custom_call.1} parent=0
    _
  %s7 = ssub.s32 1, %s5
  %s8 = scalar_select 0, %s7, %s5
  $region1: #{tpu_custom_call.1} parent=0
    #allocation2 [shape = 'u8[4096]{0}', space=vmem, size = 0x1000, scoped, tag = 'input window, operand 0, single buffered']
    #allocation3 [shape = 's32[2]{0}', space=sflag, size = 0x8, scoped, tag = 'scoped memory for tpu_custom_call.1']
    #allocation4 [shape = 'u8[4096]{0}', space=vmem, size = 0x1000, scoped, tag = 'input window, operand 1, single buffered']
    #allocation5 [shape = 's32[1]{0}', space=sflag, size = 0x4, scoped, tag = 'scoped memory for tpu_custom_call.1']
    #allocation6 [shape = 'u8[49152]{0}', space=vmem, size = 0xc000, scoped, tag = 'input window, operand 2']
    #allocation7 [shape = 'u8[49152]{0}', space=vmem, size = 0xc000, scoped, tag = 'input window, operand 3']
    %9 = vsyncpa [#allocation3], 0
    %10 = vsyncpa [#allocation5], 0
    loop: start=0, step=1, limit=4
    $region2: #{tpu_custom_call.1} parent=1 // loop_pre_header
      _
    $region3: #{tpu_custom_call.1} parent=1 // loop_header
      %s12 = sphi 0, %s16
      %p13 = scmp.ge.s32.totalorder %s12, 4
      %s20 = sphi 0, %s20
      %s22 = sphi 0, %s20
      %s23 = sphi 0, %s22
      %s37 = sphi 0, %s23
      %s41 = sphi 0, %s41
      %s43 = sphi 0, %s41
      %s44 = sphi 0, %s43
      %s58 = sphi 0, %s44
      %s64 = sphi 0, %s66
      %s67 = sphi 0, %s64
      %s68 = sphi 0, %s67
      %s84 = sphi 0, %s68
      %s90 = sphi 0, %s92
      %s93 = sphi 0, %s90
      %s94 = sphi 0, %s93
      %s110 = sphi 0, %s94
      %s116 = sphi 0, %s118
      %s119 = sphi 0, %s116
      %s120 = sphi 0, %s119
      %s136 = sphi 0, %s120
    $region4: #{tpu_custom_call.1} parent=1 // loop_header_branch
      %15 = sbr.rel (%p13) target = $region8
    $region5: #{tpu_custom_call.1} parent=1 // loop_body
      %s17 = ssub.s32 %s12, 1
      %s18 = ssub.s32 %s12, 2
      %s19 = sadd.s32 %s12, 1
      %s21 = sadd.s32 %s20, 1
      %p24 = scmp.eq.s32.totalorder %s12, 1
      %p25 = scmp.ne.s32.totalorder %s20, %s22
      %p26 = scmp.eq.s32.totalorder %s12, 0
      %p27 = por %p25, %p26
      %p28 = scmp.ne.s32.totalorder %s20, %s22
      %p29 = scmp.eq.s32.totalorder %s17, 1
      %p30 = por %p28, %p29
      %p31 = scmp.ne.s32.totalorder %s22, %s23
      %p32 = scmp.eq.s32.totalorder %s17, 0
      %p33 = por %p31, %p32
      %p34 = scmp.ne.s32.totalorder %s22, %s23
      %p35 = scmp.eq.s32.totalorder %s18, 1
      %p36 = por %p34, %p35
      %p38 = scmp.ne.s32.totalorder %s23, %s37
      %p39 = scmp.eq.s32.totalorder %s18, 0
      %p40 = por %p38, %p39
      %s42 = sadd.s32 %s41, 1
      %p45 = scmp.eq.s32.totalorder %s12, 1
      %p46 = scmp.ne.s32.totalorder %s41, %s43
      %p47 = scmp.eq.s32.totalorder %s12, 0
      %p48 = por %p46, %p47
      %p49 = scmp.ne.s32.totalorder %s41, %s43
      %p50 = scmp.eq.s32.totalorder %s17, 1
      %p51 = por %p49, %p50
      %p52 = scmp.ne.s32.totalorder %s43, %s44
      %p53 = scmp.eq.s32.totalorder %s17, 0
      %p54 = por %p52, %p53
      %p55 = scmp.ne.s32.totalorder %s43, %s44
      %p56 = scmp.eq.s32.totalorder %s18, 1
      %p57 = por %p55, %p56
      %p59 = scmp.ne.s32.totalorder %s44, %s58
      %p60 = scmp.eq.s32.totalorder %s18, 0
      %p61 = por %p59, %p60
      %s62 = ssub.s32 %s12, %s19
      %p63 = scmp.eq.s32.totalorder %s62, 0
      %s65 = sadd.s32 %s64, 1
      %s66 = scalar_select %p63, %s64, %s65
      %p69 = pneg %p63
      %p70 = scmp.eq.s32.totalorder %s12, 1
      %p71 = por %p69, %p70
      %p72 = scmp.ne.s32.totalorder %s64, %s67
      %p73 = scmp.eq.s32.totalorder %s12, 0
      %p74 = por %p72, %p73
      %p75 = scmp.ne.s32.totalorder %s64, %s67
      %p76 = scmp.eq.s32.totalorder %s17, 1
      %p77 = por %p75, %p76
      %p78 = scmp.ne.s32.totalorder %s67, %s68
      %p79 = scmp.eq.s32.totalorder %s17, 0
      %p80 = por %p78, %p79
      %p81 = scmp.ne.s32.totalorder %s67, %s68
      %p82 = scmp.eq.s32.totalorder %s18, 1
      %p83 = por %p81, %p82
      %p85 = scmp.ne.s32.totalorder %s68, %s84
      %p86 = scmp.eq.s32.totalorder %s18, 0
      %p87 = por %p85, %p86
      %s88 = ssub.s32 %s12, %s19
      %p89 = scmp.eq.s32.totalorder %s88, 0
      %s91 = sadd.s32 %s90, 1
      %s92 = scalar_select %p89, %s90, %s91
      %p95 = pneg %p89
      %p96 = scmp.eq.s32.totalorder %s12, 1
      %p97 = por %p95, %p96
      %p98 = scmp.ne.s32.totalorder %s90, %s93
      %p99 = scmp.eq.s32.totalorder %s12, 0
      %p100 = por %p98, %p99
      %p101 = scmp.ne.s32.totalorder %s90, %s93
      %p102 = scmp.eq.s32.totalorder %s17, 1
      %p103 = por %p101, %p102
      %p104 = scmp.ne.s32.totalorder %s93, %s94
      %p105 = scmp.eq.s32.totalorder %s17, 0
      %p106 = por %p104, %p105
      %p107 = scmp.ne.s32.totalorder %s93, %s94
      %p108 = scmp.eq.s32.totalorder %s18, 1
      %p109 = por %p107, %p108
      %p111 = scmp.ne.s32.totalorder %s94, %s110
      %p112 = scmp.eq.s32.totalorder %s18, 0
      %p113 = por %p111, %p112
      %s114 = ssub.s32 %s12, %s19
      %p115 = scmp.eq.s32.totalorder %s114, 0
      %s117 = sadd.s32 %s116, 1
      %s118 = scalar_select %p115, %s116, %s117
      %p121 = pneg %p115
      %p122 = scmp.eq.s32.totalorder %s12, 1
      %p123 = por %p121, %p122
      %p124 = scmp.ne.s32.totalorder %s116, %s119
      %p125 = scmp.eq.s32.totalorder %s12, 0
      %p126 = por %p124, %p125
      %p127 = scmp.ne.s32.totalorder %s116, %s119
      %p128 = scmp.eq.s32.totalorder %s17, 1
      %p129 = por %p127, %p128
      %p130 = scmp.ne.s32.totalorder %s119, %s120
      %p131 = scmp.eq.s32.totalorder %s17, 0
      %p132 = por %p130, %p131
      %p133 = scmp.ne.s32.totalorder %s119, %s120
      %p134 = scmp.eq.s32.totalorder %s18, 1
      %p135 = por %p133, %p134
      %p137 = scmp.ne.s32.totalorder %s120, %s136
      %p138 = scmp.eq.s32.totalorder %s18, 0
      %p139 = por %p137, %p138
      %p140 = scmp.le.s32.totalorder 1, %s12
      %p141 = scmp.lt.s32.totalorder %s12, 3
      %p142 = pnand %p140, %p141
      %p143 = pneg %p142
      // Predicated region
      $region9: #{tpu_custom_call.1} parent=5 // pred_check
        _
      $region10: #{tpu_custom_call.1} parent=5 // pred_check_branch
        %145 = sbr.rel (%p142) target = $region12
      $region11: #{tpu_custom_call.1} parent=5 // pred_region
        %s146 = ssub.s32 %s12, 1
        // Predicated region
        $region13: #{tpu_custom_call.1} parent=11 // pred_check
          %p147 = pneg %p33
        $region14: #{tpu_custom_call.1} parent=11 // pred_check_branch
          %149 = sbr.rel (%p147) target = $region16
        $region15: #{tpu_custom_call.1} parent=11 // pred_region
          %s151 = ssub.s32 128, 128
          %152 = vsyncadd [#allocation3], %s151
          %s153 = sshll.u32 [#allocation2], 4
          %s154 = int_to_ptr.vmem [resolvable:$true] %s153
          %159 = dma.hbm_to_vmem [thread:$0]  %s0, 128, %s154, [#allocation3], 64, 64, 4
        $region16: #{tpu_custom_call.1} parent=11 // pred_fallthru
          _
        // Predicated region
        $region17: #{tpu_custom_call.1} parent=11 // pred_check
          %p160 = pneg %p54
        $region18: #{tpu_custom_call.1} parent=11 // pred_check_branch
          %162 = sbr.rel (%p160) target = $region20
        $region19: #{tpu_custom_call.1} parent=11 // pred_region
          %s164 = ssub.s32 128, 128
          %165 = vsyncadd [#allocation5], %s164
          %s166 = sshll.u32 [#allocation4], 4
          %s167 = int_to_ptr.vmem [resolvable:$true] %s166
          %172 = dma.hbm_to_vmem [thread:$0]  %s1, 128, %s167, [#allocation5], 64, 64, 4
        $region20: #{tpu_custom_call.1} parent=11 // pred_fallthru
          _
      $region12: #{tpu_custom_call.1} parent=5 // pred_fallthru
        _
      %p173 = scmp.lt.s32.totalorder %s12, 2
      // Predicated region
      $region21: #{tpu_custom_call.1} parent=5 // pred_check
        %p174 = pneg %p173
      $region22: #{tpu_custom_call.1} parent=5 // pred_check_branch
        %176 = sbr.rel (%p174) target = $region24
      $region23: #{tpu_custom_call.1} parent=5 // pred_region
        // Predicated region
        $region25: #{tpu_custom_call.1} parent=23 // pred_check
          %p177 = pneg %p74
        $region26: #{tpu_custom_call.1} parent=23 // pred_check_branch
          %179 = sbr.rel (%p177) target = $region28
        $region27: #{tpu_custom_call.1} parent=23 // pred_region
          %s180 = sand.u32 %s12, 1
          %s181 = scalar_lea.sflag [#allocation3], %s180
          %s182 = sand.u32 %s64, 1
          %s183 = smul.addr %s182, 48
          %s184 = scalar_lea.vmem [#allocation6], %s183
          %s186 = ssub.s32 768, 768
          %187 = vsyncadd %s181, %s186
          %s188 = smul.addr %s12, 6
          %s189 = smul.addr %s188, 128
          %s190 = scalar_lea.hbm %s2, %s189
          %s191 = sshll.u32 %s184, 4
          %s192 = int_to_ptr.vmem [resolvable:$true] %s191
          %197 = dma.hbm_to_vmem [thread:$0]  %s190, 768, %s192, %s181, 128, 128, 8
        $region28: #{tpu_custom_call.1} parent=23 // pred_fallthru
          _
        // Predicated region
        $region29: #{tpu_custom_call.1} parent=23 // pred_check
          %p198 = pneg %p100
        $region30: #{tpu_custom_call.1} parent=23 // pred_check_branch
          %200 = sbr.rel (%p198) target = $region32
        $region31: #{tpu_custom_call.1} parent=23 // pred_region
          %s201 = sand.u32 %s12, 1
          %s202 = scalar_lea.sflag [#allocation3], %s201
          %s203 = sand.u32 %s90, 1
          %s204 = smul.addr %s203, 48
          %s205 = scalar_lea.vmem [#allocation7], %s204
          %s207 = ssub.s32 768, 768
          %208 = vsyncadd %s202, %s207
          %s209 = smul.addr %s12, 6
          %s210 = smul.addr %s209, 128
          %s211 = scalar_lea.hbm %s3, %s210
          %s212 = sshll.u32 %s205, 4
          %s213 = int_to_ptr.vmem [resolvable:$true] %s212
          %218 = dma.hbm_to_vmem [thread:$0]  %s211, 768, %s213, %s202, 128, 128, 8
        $region32: #{tpu_custom_call.1} parent=23 // pred_fallthru
          _
      $region24: #{tpu_custom_call.1} parent=5 // pred_fallthru
        _
      %p219 = scmp.le.s32.totalorder 1, %s12
      %p220 = scmp.lt.s32.totalorder %s12, 3
      %p221 = pnand %p219, %p220
      %p222 = pneg %p221
      // Predicated region
      $region33: #{tpu_custom_call.1} parent=5 // pred_check
        _
      $region34: #{tpu_custom_call.1} parent=5 // pred_check_branch
        %224 = sbr.rel (%p221) target = $region36
      $region35: #{tpu_custom_call.1} parent=5 // pred_region
        %s225 = ssub.s32 %s12, 1
        // Predicated region
        $region37: #{tpu_custom_call.1} parent=35 // pred_check
          %p226 = pneg %p33
        $region38: #{tpu_custom_call.1} parent=35 // pred_check_branch
          %228 = sbr.rel (%p226) target = $region40
        $region39: #{tpu_custom_call.1} parent=35 // pred_region
          %229 = dma.done [#allocation3], 128
        $region40: #{tpu_custom_call.1} parent=35 // pred_fallthru
          _
        // Predicated region
        $region41: #{tpu_custom_call.1} parent=35 // pred_check
          %p230 = pneg %p54
        $region42: #{tpu_custom_call.1} parent=35 // pred_check_branch
          %232 = sbr.rel (%p230) target = $region44
        $region43: #{tpu_custom_call.1} parent=35 // pred_region
          %233 = dma.done [#allocation5], 128
        $region44: #{tpu_custom_call.1} parent=35 // pred_fallthru
          _
        %s234 = sand.u32 %s17, 1
        %s235 = scalar_lea.sflag [#allocation3], %s234
        %s236 = sand.u32 %s67, 1
        %s237 = smul.addr %s236, 48
        %s238 = scalar_lea.vmem [#allocation6], %s237
        // Predicated region
        $region45: #{tpu_custom_call.1} parent=35 // pred_check
          %p239 = pneg %p80
        $region46: #{tpu_custom_call.1} parent=35 // pred_check_branch
          %241 = sbr.rel (%p239) target = $region48
        $region47: #{tpu_custom_call.1} parent=35 // pred_region
          %242 = dma.done %s235, 768
        $region48: #{tpu_custom_call.1} parent=35 // pred_fallthru
          _
        %s243 = sand.u32 %s17, 1
        %s244 = scalar_lea.sflag [#allocation3], %s243
        %s245 = sand.u32 %s93, 1
        %s246 = smul.addr %s245, 48
        %s247 = scalar_lea.vmem [#allocation7], %s246
        // Predicated region
        $region49: #{tpu_custom_call.1} parent=35 // pred_check
          %p248 = pneg %p106
        $region50: #{tpu_custom_call.1} parent=35 // pred_check_branch
          %250 = sbr.rel (%p248) target = $region52
        $region51: #{tpu_custom_call.1} parent=35 // pred_region
          %251 = dma.done %s244, 768
        $region52: #{tpu_custom_call.1} parent=35 // pred_fallthru
          _
        %p252 = pneg %p33
        %p253 = pneg %p30
        %p254 = pneg %p54
        %p255 = pneg %p51
        %s256 = sand.u32 %s17, 1
        %s257 = scalar_lea.sflag [#allocation3], %s256
        %s258 = sand.u32 %s67, 1
        %s259 = smul.addr %s258, 48
        %s260 = scalar_lea.vmem [#allocation6], %s259
        %p261 = pneg %p80
        %p262 = pneg %p77
        %s263 = sand.u32 %s17, 1
        %s264 = scalar_lea.sflag [#allocation3], %s263
        %s265 = sand.u32 %s93, 1
        %s266 = smul.addr %s265, 48
        %s267 = scalar_lea.vmem [#allocation7], %s266
        %p268 = pneg %p106
        %p269 = pneg %p103
        %p270 = pneg %p132
        %p271 = pneg %p129
        %p272 = scmp.lt.s32.totalorder %s17, 1
        %s273 = scalar_select %p272, %s17, 1
        %s274 = scalar_lea.vmem %s4, %s273
        %p275 = scmp.lt.s32.totalorder %s17, 1
        %s276 = scalar_select %p275, %s17, 1
        %s277 = scalar_lea.vmem %s4, %s276
        %v279 = vld [vmem:[%s238] sm:$0xff]
        %v280 = vld [vmem:[%s238 + $0x8] sm:$0xff]
        %v281 = vld [vmem:[%s238 + $0x10] sm:$0xff]
        %v282 = vld [vmem:[%s238 + $0x18] sm:$0xff]
        %v283 = vld [vmem:[%s238 + $0x20] sm:$0xff]
        %v284 = vld [vmem:[%s238 + $0x28] sm:$0xff]
        %v285 = vld [vmem:[%s247] sm:$0xff]
        %v286 = vld [vmem:[%s247 + $0x8] sm:$0xff]
        %v287 = vld [vmem:[%s247 + $0x10] sm:$0xff]
        %v288 = vld [vmem:[%s247 + $0x18] sm:$0xff]
        %v289 = vld [vmem:[%s247 + $0x20] sm:$0xff]
        %v290 = vld [vmem:[%s247 + $0x28] sm:$0xff]
        %v291 = vsub.f32 %v279, %v285
        %v292 = vsub.f32 %v280, %v286
        %v293 = vsub.f32 %v281, %v287
        %v294 = vsub.f32 %v282, %v288
        %v295 = vsub.f32 %v283, %v289
        %v296 = vsub.f32 %v284, %v290
        %v297 = vmul.f32 %v291, 0.299
        %v298 = vmul.f32 %v292, 0.299
        %v299 = vmul.f32 %v293, 0.587
        %v300 = vmul.f32 %v294, 0.587
        %v301 = vadd.f32 %v297, %v299
        %v302 = vadd.f32 %v298, %v300
        %v303 = vmul.f32 %v295, 0.114
        %v304 = vmul.f32 %v296, 0.114
        %v305 = vadd.f32 %v301, %v303
        %v306 = vadd.f32 %v302, %v304
        %v307 = vmul.f32 %v291, -0.14713
        %v308 = vmul.f32 %v292, -0.14713
        %v309 = vmul.f32 %v293, 0.28886
        %v310 = vmul.f32 %v294, 0.28886
        %v311 = vsub.f32 %v307, %v309
        %v312 = vsub.f32 %v308, %v310
        %v313 = vmul.f32 %v295, 0.436
        %v314 = vmul.f32 %v296, 0.436
        %v315 = vadd.f32 %v311, %v313
        %v316 = vadd.f32 %v312, %v314
        %v317 = vmul.f32 %v291, 0.615
        %v318 = vmul.f32 %v292, 0.615
        %v319 = vmul.f32 %v293, 0.51499
        %v320 = vmul.f32 %v294, 0.51499
        %v321 = vsub.f32 %v317, %v319
        %v322 = vsub.f32 %v318, %v320
        %v323 = vmul.f32 %v295, 0.10001
        %v324 = vmul.f32 %v296, 0.10001
        %v325 = vsub.f32 %v321, %v323
        %v326 = vsub.f32 %v322, %v324
        %v327 = vld [vmem:[#allocation2] sm:$0xf]
        %v328 = vld [vmem:[#allocation2 + $0x4] sm:$0xf]
        %v329 = vld [vmem:[#allocation4] sm:$0xf]
        %v330 = vld [vmem:[#allocation4 + $0x4] sm:$0xf]
        %v331 = vpack.c.bf16 %v306, %v305
        %v332 = vpack.c.bf16 %v316, %v315
        %v333 = vpack.c.bf16 %v326, %v325
        %v336 = vunpack.c.l.b16 %v329
        %v337 = vunpack.c.l.b16 %v330
        %v338 = vpack.c.b16 %v337, %v336
        %vm340 = vcmask 130048
        %v342 = vsel %vm340, %v331, 0
        %v345 = vsel %vm340, %v332, 0
        %v348 = vsel %vm340, %v333, 0
        %350 = vmatprep.subr.bf16.mxu0 0
        %351 = vmatpush1.bf16.msra.mxu0 %v338
        %352 = vmatprep.subr.bf16.mxu0 0
        %353 = vmatpush1.bf16.msra.mxu0 0
        %354 = vmatprep.subr.bf16.mxu0 0
        %355 = vmatpush1.bf16.msra.mxu0 0
        %356 = vmatprep.subr.bf16.mxu0 0
        %357 = vmatpush1.bf16.msra.mxu0 0
        %358 = vmatprep.subr.bf16.mxu0 0
        %359 = vmatpush1.bf16.msra.mxu0 0
        %360 = vmatprep.subr.bf16.mxu0 0
        %361 = vmatpush1.bf16.msra.mxu0 0
        %362 = vmatprep.subr.bf16.mxu0 0
        %363 = vmatpush1.bf16.msra.mxu0 0
        %364 = vmatprep.subr.bf16.mxu0 0
        %365 = vmatpush1.bf16.msra.mxu0 0
        %366 = vmatprep.subr.bf16.mxu0 0
        %367 = vmatpush1.bf16.msra.mxu0 0
        %368 = vmatprep.subr.bf16.mxu0 0
        %369 = vmatpush1.bf16.msra.mxu0 0
        %370 = vmatprep.subr.bf16.mxu0 0
        %371 = vmatpush1.bf16.msra.mxu0 0
        %372 = vmatprep.subr.bf16.mxu0 0
        %373 = vmatpush1.bf16.msra.mxu0 0
        %374 = vmatprep.subr.bf16.mxu0 0
        %375 = vmatpush1.bf16.msra.mxu0 0
        %376 = vmatprep.subr.bf16.mxu0 0
        %377 = vmatpush1.bf16.msra.mxu0 0
        %378 = vmatprep.subr.bf16.mxu0 0
        %379 = vmatpush1.bf16.msra.mxu0 0
        %380 = vmatprep.subr.bf16.mxu0 0
        %381 = vmatpush1.bf16.msra.mxu0 0
        %382 = vmatprep.mubr.bf16.mxu0 0
        %383 = vmatmul.mubr.bf16.gmra.mrb[0].mxu0 %v342
        %v384 = vpop.f32.mrb[0].mxu0
        %v385 = vadd.f32 0.0, %v384
        %v386 = vpop.f32.mrb[0].mxu0
        %v387 = vpop.f32.mrb[0].mxu0
        %v388 = vadd.f32 0.0, %v387
        %v389 = vpop.f32.mrb[0].mxu0
        %390 = vmatprep.mubr.bf16.mxu0 0
        %391 = vmatmul.mubr.bf16.gmra.mrb[0].mxu0 %v345
        %v392 = vpop.f32.mrb[0].mxu0
        %v393 = vadd.f32 0.0, %v392
        %v394 = vpop.f32.mrb[0].mxu0
        %v395 = vpop.f32.mrb[0].mxu0
        %v396 = vadd.f32 0.0, %v395
        %v397 = vpop.f32.mrb[0].mxu0
        %398 = vmatprep.mubr.bf16.mxu0 0
        %399 = vmatmul.mubr.bf16.gmra.mrb[0].mxu0 %v348
        %v400 = vpop.f32.mrb[0].mxu0
        %v401 = vadd.f32 0.0, %v400
        %v402 = vpop.f32.mrb[0].mxu0
        %v403 = vpop.f32.mrb[0].mxu0
        %v404 = vadd.f32 0.0, %v403
        %v405 = vpop.f32.mrb[0].mxu0
        %406 = vdwg.mxu0
        %409 = vrot.lane.b32.xlu0 %v393, 16
        %v410 = vpop.permute.xlu0 %409
        %411 = vrot.lane.b32.xlu0 %v396, 16
        %v412 = vpop.permute.xlu0 %411
        %417 = vrot.lane.b32.xlu0 %v401, 32
        %v418 = vpop.permute.xlu0 %417
        %419 = vrot.lane.b32.xlu0 %v404, 32
        %v420 = vpop.permute.xlu0 %419
        %v423 = vsel %vm340, %v385, %v410
        %v424 = vsel %vm340, %v388, %v412
        %vm425 = vcmask 261120
        %v426 = vsel %vm425, %v423, %v418
        %v427 = vsel %vm425, %v424, %v420
        %v428 = vpack.c.bf16 %v427, %v426
        %v431 = vunpack.c.l.b16 %v327
        %v432 = vunpack.c.l.b16 %v328
        %v433 = vpack.c.b16 %v432, %v431
        %v435 = vsel %vm340, %v433, 0
        %437 = vmatprep.subr.bf16.mxu0 0
        %438 = vmatpush1.bf16.msra.mxu0 %v428
        %439 = vmatprep.subr.bf16.mxu0 0
        %440 = vmatpush1.bf16.msra.mxu0 0
        %441 = vmatprep.subr.bf16.mxu0 0
        %442 = vmatpush1.bf16.msra.mxu0 0
        %443 = vmatprep.subr.bf16.mxu0 0
        %444 = vmatpush1.bf16.msra.mxu0 0
        %445 = vmatprep.subr.bf16.mxu0 0
        %446 = vmatpush1.bf16.msra.mxu0 0
        %447 = vmatprep.subr.bf16.mxu0 0
        %448 = vmatpush1.bf16.msra.mxu0 0
        %449 = vmatprep.subr.bf16.mxu0 0
        %450 = vmatpush1.bf16.msra.mxu0 0
        %451 = vmatprep.subr.bf16.mxu0 0
        %452 = vmatpush1.bf16.msra.mxu0 0
        %453 = vmatprep.subr.bf16.mxu0 0
        %454 = vmatpush1.bf16.msra.mxu0 0
        %455 = vmatprep.subr.bf16.mxu0 0
        %456 = vmatpush1.bf16.msra.mxu0 0
        %457 = vmatprep.subr.bf16.mxu0 0
        %458 = vmatpush1.bf16.msra.mxu0 0
        %459 = vmatprep.subr.bf16.mxu0 0
        %460 = vmatpush1.bf16.msra.mxu0 0
        %461 = vmatprep.subr.bf16.mxu0 0
        %462 = vmatpush1.bf16.msra.mxu0 0
        %463 = vmatprep.subr.bf16.mxu0 0
        %464 = vmatpush1.bf16.msra.mxu0 0
        %465 = vmatprep.subr.bf16.mxu0 0
        %466 = vmatpush1.bf16.msra.mxu0 0
        %467 = vmatprep.subr.bf16.mxu0 0
        %468 = vmatpush1.bf16.msra.mxu0 0
        %469 = vmatprep.mubr.bf16.mxu0 0
        %470 = vmatmul.mubr.bf16.gmra.mrb[0].mxu0 %v435
        %v471 = vpop.f32.mrb[0].mxu0
        %v472 = vadd.f32 0.0, %v471
        %v473 = vpop.f32.mrb[0].mxu0
        %v474 = vpop.f32.mrb[0].mxu0
        %v475 = vadd.f32 0.0, %v474
        %v476 = vpop.f32.mrb[0].mxu0
        %477 = vdwg.mxu0
        %v478 = vmul.f32 %v472, %v472
        %v479 = vmul.f32 %v475, %v475
        %vm480 = vcmask 392192
        %v481 = vsel %vm480, %v478, 0.0
        %v482 = vsel %vm480, %v479, 0.0
        %v483 = vadd.f32 %v481, %v482
        %484 = vadd.xlane.f32.xlu0 %v483
        %v485 = vpop.xlane.xlu0 %484
        %v486 = vrot.slane %v485, 4
        %v487 = vadd.f32 %v485, %v486
        %v488 = vrot.slane %v487, 2
        %v489 = vadd.f32 %v487, %v488
        %v490 = vrot.slane %v489, 1
        %v491 = vadd.f32 %v489, %v490
        %s492 = vtos %v491
        %v493 = vstv %s492
        %vm494 = vcmask 0
        %495 = vst.msk [vmem:[%s277] sm:$0x1] %vm494, %v493
        %p496 = scmp.lt.s32.totalorder %s17, 1
        %s497 = scalar_select %p496, %s17, 1
        %s498 = scalar_lea.vmem %s4, %s497
        // Predicated region
        $region53: #{tpu_custom_call.1} parent=35 // pred_check
          %p499 = pneg %p129
        $region54: #{tpu_custom_call.1} parent=35 // pred_check_branch
          %501 = sbr.rel (%p499) target = $region56
        $region55: #{tpu_custom_call.1} parent=35 // pred_region
          _
        $region56: #{tpu_custom_call.1} parent=35 // pred_fallthru
          _
      $region36: #{tpu_custom_call.1} parent=5 // pred_fallthru
        _
      %p502 = scmp.le.s32.totalorder 2, %s12
      // Predicated region
      $region57: #{tpu_custom_call.1} parent=5 // pred_check
        %p503 = pneg %p502
      $region58: #{tpu_custom_call.1} parent=5 // pred_check_branch
        %505 = sbr.rel (%p503) target = $region60
      $region59: #{tpu_custom_call.1} parent=5 // pred_region
        %s506 = ssub.s32 %s12, 2
        // Predicated region
        $region61: #{tpu_custom_call.1} parent=59 // pred_check
          %p507 = pneg %p135
        $region62: #{tpu_custom_call.1} parent=59 // pred_check_branch
          %509 = sbr.rel (%p507) target = $region64
        $region63: #{tpu_custom_call.1} parent=59 // pred_region
          %p510 = scmp.lt.s32.totalorder %s18, 1
          %s511 = scalar_select %p510, %s18, 1
          %s512 = scalar_lea.vmem %s4, %s511
        $region64: #{tpu_custom_call.1} parent=59 // pred_fallthru
          _
      $region60: #{tpu_custom_call.1} parent=5 // pred_fallthru
        _
    $region6: #{tpu_custom_call.1} parent=1 // loop_footer
      %s16 = sadd.s32 1, %s12
    $region7: #{tpu_custom_call.1} parent=1 // loop_footer_branch
      %11 = sbr.rel target = $region3
    $region8: #{tpu_custom_call.1} parent=1 // loop_exit
      _
    %513 = vsyncpa [#allocation3], 1
    %s514 = scalar_lea.sflag [#allocation3], 1
    %515 = vsyncpa %s514, 1
    %516 = vsyncpa [#allocation5], 1

</llo_original>
